<compile_context>
chip_gen: v5e
topology: v5e:2x2
jax: 0.10.0
libtpu: 0.0.40
codegen_flags: <defaults>
</compile_context>

<pallas_src>
import functools

import jax
import jax.numpy as jnp
from jax.experimental import pallas as pl
from jax.experimental.pallas import tpu as pltpu


LEAKY_SLOPE = 0.01
BN_EPS = 1e-5
LANE = 128


def _round_up(n, m):
    return ((n + m - 1) // m) * m


def _bn_leaky(h, gamma, beta, inv_b):
    """Training-mode BatchNorm1d + leaky_relu with one-pass batch stats."""
    s1 = jnp.sum(h, axis=0, keepdims=True)          # independent XLU reduce
    s2 = jnp.sum(h * h, axis=0, keepdims=True)      # independent XLU reduce
    mean = s1 * inv_b
    var = s2 * inv_b - mean * mean                  # biased batch variance
    scale = jax.lax.rsqrt(var + BN_EPS) * gamma     # fused scale
    y = (h - mean) * scale + beta
    return jnp.where(y >= 0, y, LEAKY_SLOPE * y)


def encoder_kernel(x_ref, slab_ref, out_ref, *, r_w1, wcols, vec_base, inv_b):
    # Parameter slab layout (rows), all widths padded to wcols (=128 here):
    #   [0              : r_w1            )  w1  (in_p, W)
    #   [r_w1           : r_w1 + W        )  w2  (W, W)    rows >= d2 are 0
    #   [r_w1 + W       : r_w1 + 2W       )  w3  (W, W)    rows >= d1 are 0
    #   [vec_base + k]  k = 0..4             g1, be1, g2, be2, b3 (zero-padded)
    w1 = slab_ref[0:r_w1, :]
    w2 = slab_ref[r_w1:r_w1 + wcols, :]
    w3 = slab_ref[r_w1 + wcols:r_w1 + 2 * wcols, :]

    # Single-row reads straight from the ref (no 8x128 table load + sublane
    # extraction of the loaded value on the critical path).
    g1 = slab_ref[vec_base + 0:vec_base + 1, :]
    be1 = slab_ref[vec_base + 1:vec_base + 2, :]
    g2 = slab_ref[vec_base + 2:vec_base + 3, :]
    be2 = slab_ref[vec_base + 3:vec_base + 4, :]
    b3 = slab_ref[vec_base + 4:vec_base + 5, :]

    x = x_ref[...]

    # lin_1 (bias cancelled exactly by training-mode BN) -> bn_1 -> leaky_relu
    h1 = jnp.dot(x, w1, preferred_element_type=jnp.float32)
    h1 = _bn_leaky(h1, g1, be1, inv_b)

    # lin_2 (bias cancelled by BN) -> bn_2 -> leaky_relu
    h2 = jnp.dot(h1, w2, preferred_element_type=jnp.float32)
    h2 = _bn_leaky(h2, g2, be2, inv_b)

    # linear_means (bias kept)
    out_ref[...] = (
        jnp.dot(h2, w3, preferred_element_type=jnp.float32) + b3
    ).astype(out_ref.dtype)


def init_params(key, input_shape, code_length, d=10):
    c, h, w = input_shape
    in_dim = c * h * w
    k = jax.random.split(key, 3)

    def lin_init(kk, fan_in, fan_out):
        # PyTorch-style uniform bound = 1/sqrt(fan_in); weight pre-transposed.
        bound = 1.0 / jnp.sqrt(fan_in)
        kw, kb = jax.random.split(kk)
        w_ = jax.random.uniform(kw, (fan_in, fan_out), jnp.float32, -bound, bound)
        b_ = jax.random.uniform(kb, (1, fan_out), jnp.float32, -bound, bound)
        return w_, b_

    w1, b1 = lin_init(k[0], in_dim, 2 * d)
    w2, b2 = lin_init(k[1], 2 * d, d)
    w3, b3 = lin_init(k[2], d, code_length)
    # BatchNorm default init: gamma=1, beta=0
    g1 = jnp.ones((1, 2 * d), jnp.float32)
    be1 = jnp.zeros((1, 2 * d), jnp.float32)
    g2 = jnp.ones((1, d), jnp.float32)
    be2 = jnp.zeros((1, d), jnp.float32)
    return dict(w1=w1, b1=b1, g1=g1, be1=be1,
                w2=w2, b2=b2, g2=g2, be2=be2,
                w3=w3, b3=b3)


def make_fmnist_encoder_old(params, input_shape, code_length):
    """Pads/packs parameters once and returns a jitted forward(x) callable."""
    c, h, w_sp = input_shape
    in_dim = c * h * w_sp
    d2 = params["w1"].shape[1]   # 2*d
    d1 = params["w2"].shape[1]   # d

    in_p = _round_up(in_dim, LANE)
    wcols = _round_up(max(d2, d1, code_length), LANE)
    vec_base = in_p + 2 * wcols
    n_rows = vec_base + 8          # multiple of 8 -> sublane-aligned slab

    # Build the single lane-dense parameter slab (done ONCE, cached).
    # Invariant: all padded lanes of gamma/beta/b3 are exactly zero.
    slab = jnp.zeros((n_rows, wcols), jnp.float32)
    slab = slab.at[:in_dim, :d2].set(params["w1"].astype(jnp.float32))
    slab = slab.at[in_p:in_p + d2, :d1].set(params["w2"].astype(jnp.float32))
    slab = slab.at[in_p + wcols:in_p + wcols + d1, :code_length].set(
        params["w3"].astype(jnp.float32))
    slab = slab.at[vec_base + 0, :d2].set(params["g1"][0])
    slab = slab.at[vec_base + 1, :d2].set(params["be1"][0])
    slab = slab.at[vec_base + 2, :d1].set(params["g2"][0])
    slab = slab.at[vec_base + 3, :d1].set(params["be2"][0])
    slab = slab.at[vec_base + 4, :code_length].set(params["b3"][0])
    slab = jax.device_put(slab)
    slab_bytes = 4 * slab.size

    def forward(x_nchw, slab_arg):
        b = x_nchw.shape[0]
        # 'b c h w -> b (c h w)', zero-padded to the lane-dense width.
        x_flat = x_nchw.reshape(b, -1).astype(jnp.float32)
        x_p = jnp.pad(x_flat, ((0, 0), (0, in_p - in_dim)))

        kernel = functools.partial(
            encoder_kernel, r_w1=in_p, wcols=wcols,
            vec_base=vec_base, inv_b=1.0 / b)

        vmem = pl.BlockSpec(memory_space=pltpu.MemorySpace.VMEM)
        out_p = pl.pallas_call(
            kernel,
            out_shape=jax.ShapeDtypeStruct((b, wcols), jnp.float32),
            in_specs=[vmem, vmem],
            out_specs=vmem,
            cost_estimate=pl.CostEstimate(
                flops=2 * b * (in_dim * d2 + d2 * d1 + d1 * code_length),
                transcendentals=2 * wcols,                 # two rsqrt rows
                bytes_accessed=4 * b * (in_p + wcols) + slab_bytes),
        )(x_p, slab_arg)

        # variational=False -> return means only.  The slice fuses into this
        # single jitted dispatch; drop it if the consumer accepts (B, wcols).
        # TODO(synk): variational=True branch (linear_log_var + cat) not wired.
        return out_p[:, :code_length]

    jitted = jax.jit(forward)
    return lambda x: jitted(x, slab)


def reference_forward(x_nchw, params):
    # Faithful to the PyTorch module (biases included; BN training mode).
    b = x_nchw.shape[0]
    x = x_nchw.reshape(b, -1).astype(jnp.float32)
    h1 = x @ params["w1"] + params["b1"]
    m = h1.mean(0, keepdims=True)
    v = ((h1 - m) ** 2).mean(0, keepdims=True)
    h1 = (h1 - m) / jnp.sqrt(v + BN_EPS) * params["g1"] + params["be1"]
    h1 = jnp.where(h1 >= 0, h1, LEAKY_SLOPE * h1)
    h2 = h1 @ params["w2"] + params["b2"]
    m = h2.mean(0, keepdims=True)
    v = ((h2 - m) ** 2).mean(0, keepdims=True)
    h2 = (h2 - m) / jnp.sqrt(v + BN_EPS) * params["g2"] + params["be2"]
    h2 = jnp.where(h2 >= 0, h2, LEAKY_SLOPE * h2)
    return h2 @ params["w3"] + params["b3"]


if __name__ == "__main__":
    key = jax.random.PRNGKey(0)
    k_x, k_p = jax.random.split(key)

    input_shape = (1, 16, 16)   # (c, h, w) — small FMNIST-like sample
    code_length = 32
    batch = 8

    x = jax.random.normal(k_x, (batch,) + input_shape, jnp.float32)
    params = init_params(k_p, input_shape, code_length)

    encoder = make_fmnist_encoder_old(params, input_shape, code_length)
    out = jax.block_until_ready(encoder(x))

    ref = reference_forward(x, params)
    assert out.shape == (batch, code_length)
    # One-pass BN + dropped (mathematically cancelled) b1/b2 change f32
    # rounding slightly vs the two-pass reference; tolerance covers it.
    assert jnp.allclose(out, ref, atol=2e-4, rtol=2e-4), "mismatch vs reference"

    print("KERNEL_OK")
</pallas_src>

<mosaic_0001>
module attributes {stable_mosaic.version = 11 : i64} {
  func.func @encoder_kernel(%arg0: memref<8x256xf32, #tpu.memory_space<vmem>>, %arg1: memref<520x128xf32, #tpu.memory_space<vmem>>, %arg2: memref<8x128xf32, #tpu.memory_space<vmem>>) attributes {dimension_semantics = [], scalar_prefetch = 0 : i64, scratch_operands = 0 : i64, tpu.core_type = #tpu.core_type<tc>} {
    %c0 = arith.constant 0 : index
    %c0_0 = arith.constant 0 : index
    %0 = vector.load %arg1[%c0, %c0_0] : memref<520x128xf32, #tpu.memory_space<vmem>>, vector<256x128xf32>
    %c256 = arith.constant 256 : index
    %c0_1 = arith.constant 0 : index
    %1 = vector.load %arg1[%c256, %c0_1] : memref<520x128xf32, #tpu.memory_space<vmem>>, vector<128x128xf32>
    %c384 = arith.constant 384 : index
    %c0_2 = arith.constant 0 : index
    %2 = vector.load %arg1[%c384, %c0_2] : memref<520x128xf32, #tpu.memory_space<vmem>>, vector<128x128xf32>
    %c512 = arith.constant 512 : index
    %c0_3 = arith.constant 0 : index
    %3 = vector.load %arg1[%c512, %c0_3] : memref<520x128xf32, #tpu.memory_space<vmem>>, vector<1x128xf32>
    %c513 = arith.constant 513 : index
    %c0_4 = arith.constant 0 : index
    %4 = vector.load %arg1[%c513, %c0_4] : memref<520x128xf32, #tpu.memory_space<vmem>>, vector<1x128xf32>
    %c514 = arith.constant 514 : index
    %c0_5 = arith.constant 0 : index
    %5 = vector.load %arg1[%c514, %c0_5] : memref<520x128xf32, #tpu.memory_space<vmem>>, vector<1x128xf32>
    %c515 = arith.constant 515 : index
    %c0_6 = arith.constant 0 : index
    %6 = vector.load %arg1[%c515, %c0_6] : memref<520x128xf32, #tpu.memory_space<vmem>>, vector<1x128xf32>
    %c516 = arith.constant 516 : index
    %c0_7 = arith.constant 0 : index
    %7 = vector.load %arg1[%c516, %c0_7] : memref<520x128xf32, #tpu.memory_space<vmem>>, vector<1x128xf32>
    %c0_8 = arith.constant 0 : index
    %c0_9 = arith.constant 0 : index
    %8 = vector.load %arg0[%c0_8, %c0_9] : memref<8x256xf32, #tpu.memory_space<vmem>>, vector<8x256xf32>
    %cst = arith.constant dense<0.000000e+00> : vector<8x128xf32>
    %9 = tpu.matmul %8, %0, %cst {dimension_numbers = #tpu.dot_dimension_numbers<[1], [0], [0], [1], [0, 0, 1, 1], [], []>} : vector<8x256xf32>, vector<256x128xf32>, vector<8x128xf32> -> vector<8x128xf32>
    %cst_10 = arith.constant dense<0.000000e+00> : vector<128xf32>
    %10 = vector.multi_reduction <add>, %9, %cst_10 [0] : vector<8x128xf32> to vector<128xf32>
    %11 = vector.shape_cast %10 : vector<128xf32> to vector<1x128xf32>
    %12 = arith.mulf %9, %9 : vector<8x128xf32>
    %cst_11 = arith.constant dense<0.000000e+00> : vector<128xf32>
    %13 = vector.multi_reduction <add>, %12, %cst_11 [0] : vector<8x128xf32> to vector<128xf32>
    %14 = vector.shape_cast %13 : vector<128xf32> to vector<1x128xf32>
    %cst_12 = arith.constant 1.250000e-01 : f32
    %15 = vector.broadcast %cst_12 : f32 to vector<1x128xf32>
    %16 = arith.mulf %11, %15 : vector<1x128xf32>
    %cst_13 = arith.constant 1.250000e-01 : f32
    %17 = vector.broadcast %cst_13 : f32 to vector<1x128xf32>
    %18 = arith.mulf %14, %17 : vector<1x128xf32>
    %19 = arith.mulf %16, %16 : vector<1x128xf32>
    %20 = arith.subf %18, %19 : vector<1x128xf32>
    %cst_14 = arith.constant 9.99999974E-6 : f32
    %21 = vector.broadcast %cst_14 : f32 to vector<1x128xf32>
    %22 = arith.addf %20, %21 : vector<1x128xf32>
    %23 = math.rsqrt %22 : vector<1x128xf32>
    %24 = arith.mulf %23, %3 : vector<1x128xf32>
    %25 = vector.broadcast %16 : vector<1x128xf32> to vector<8x128xf32>
    %26 = arith.subf %9, %25 : vector<8x128xf32>
    %27 = vector.broadcast %24 : vector<1x128xf32> to vector<8x128xf32>
    %28 = arith.mulf %26, %27 : vector<8x128xf32>
    %29 = vector.broadcast %4 : vector<1x128xf32> to vector<8x128xf32>
    %30 = arith.addf %28, %29 : vector<8x128xf32>
    %cst_15 = arith.constant 0.000000e+00 : f32
    %31 = vector.broadcast %cst_15 : f32 to vector<8x128xf32>
    %32 = arith.cmpf oge, %30, %31 : vector<8x128xf32>
    %cst_16 = arith.constant 0.00999999977 : f32
    %33 = vector.broadcast %cst_16 : f32 to vector<8x128xf32>
    %34 = arith.mulf %33, %30 : vector<8x128xf32>
    %35 = arith.select %32, %30, %34 : vector<8x128xi1>, vector<8x128xf32>
    %cst_17 = arith.constant dense<0.000000e+00> : vector<8x128xf32>
    %36 = tpu.matmul %35, %1, %cst_17 {dimension_numbers = #tpu.dot_dimension_numbers<[1], [0], [0], [1], [0, 0, 1, 1], [], []>} : vector<8x128xf32>, vector<128x128xf32>, vector<8x128xf32> -> vector<8x128xf32>
    %cst_18 = arith.constant dense<0.000000e+00> : vector<128xf32>
    %37 = vector.multi_reduction <add>, %36, %cst_18 [0] : vector<8x128xf32> to vector<128xf32>
    %38 = vector.shape_cast %37 : vector<128xf32> to vector<1x128xf32>
    %39 = arith.mulf %36, %36 : vector<8x128xf32>
    %cst_19 = arith.constant dense<0.000000e+00> : vector<128xf32>
    %40 = vector.multi_reduction <add>, %39, %cst_19 [0] : vector<8x128xf32> to vector<128xf32>
    %41 = vector.shape_cast %40 : vector<128xf32> to vector<1x128xf32>
    %cst_20 = arith.constant 1.250000e-01 : f32
    %42 = vector.broadcast %cst_20 : f32 to vector<1x128xf32>
    %43 = arith.mulf %38, %42 : vector<1x128xf32>
    %cst_21 = arith.constant 1.250000e-01 : f32
    %44 = vector.broadcast %cst_21 : f32 to vector<1x128xf32>
    %45 = arith.mulf %41, %44 : vector<1x128xf32>
    %46 = arith.mulf %43, %43 : vector<1x128xf32>
    %47 = arith.subf %45, %46 : vector<1x128xf32>
    %cst_22 = arith.constant 9.99999974E-6 : f32
    %48 = vector.broadcast %cst_22 : f32 to vector<1x128xf32>
    %49 = arith.addf %47, %48 : vector<1x128xf32>
    %50 = math.rsqrt %49 : vector<1x128xf32>
    %51 = arith.mulf %50, %5 : vector<1x128xf32>
    %52 = vector.broadcast %43 : vector<1x128xf32> to vector<8x128xf32>
    %53 = arith.subf %36, %52 : vector<8x128xf32>
    %54 = vector.broadcast %51 : vector<1x128xf32> to vector<8x128xf32>
    %55 = arith.mulf %53, %54 : vector<8x128xf32>
    %56 = vector.broadcast %6 : vector<1x128xf32> to vector<8x128xf32>
    %57 = arith.addf %55, %56 : vector<8x128xf32>
    %cst_23 = arith.constant 0.000000e+00 : f32
    %58 = vector.broadcast %cst_23 : f32 to vector<8x128xf32>
    %59 = arith.cmpf oge, %57, %58 : vector<8x128xf32>
    %cst_24 = arith.constant 0.00999999977 : f32
    %60 = vector.broadcast %cst_24 : f32 to vector<8x128xf32>
    %61 = arith.mulf %60, %57 : vector<8x128xf32>
    %62 = arith.select %59, %57, %61 : vector<8x128xi1>, vector<8x128xf32>
    %cst_25 = arith.constant dense<0.000000e+00> : vector<8x128xf32>
    %63 = tpu.matmul %62, %2, %cst_25 {dimension_numbers = #tpu.dot_dimension_numbers<[1], [0], [0], [1], [0, 0, 1, 1], [], []>} : vector<8x128xf32>, vector<128x128xf32>, vector<8x128xf32> -> vector<8x128xf32>
    %64 = vector.broadcast %7 : vector<1x128xf32> to vector<8x128xf32>
    %65 = arith.addf %63, %64 : vector<8x128xf32>
    %c0_26 = arith.constant 0 : index
    %c0_27 = arith.constant 0 : index
    %66 = vector.load %arg2[%c0_26, %c0_27] : memref<8x128xf32, #tpu.memory_space<vmem>>, vector<8x128xf32>
    tpu.vector_store %arg2[%c0_26, %c0_27], %65 {strides = array<i32>} : memref<8x128xf32, #tpu.memory_space<vmem>>, vector<8x128xf32>,
    return
  }
}

</mosaic_0001>

<llo_original>
// kernel: forward.1
$region0: #{forward.1}
  #allocation0 [shape = 'u32[]', space=smem, size = 0x4, offset = 0x4, fixed_abs, tag = 'smem constant byte address 0x4 - core index']
  #allocation1 [shape = 'u32[72,128]{1,0:T(1,128)}', space=vmem, size = 0x9000, scoped, tag = 'internal scratch']
  %s0 = inlined_call_operand.vmem [shape: f32[8,256], index: 0, kind: input, shape index: {}]
  %s1 = inlined_call_operand.hbm [shape: f32[520,128], index: 1, kind: input, shape index: {}]
  %s2 = inlined_call_operand.hbm [shape: f32[8,128], index: 2, kind: output, shape index: {}]
  %s3 = sld [smem:[#allocation0]]
  $region22: #{forward.1} parent=0
    _
  %s5 = ssub.s32 1, %s3
  %s6 = scalar_select 0, %s5, %s3
  $region1: #{forward.1} parent=0
    #allocation2 [shape = 'u8[266240]{0}', space=vmem, size = 0x41000, scoped, tag = 'input window, operand 1, single buffered']
    #allocation3 [shape = 's32[1]{0}', space=sflag, size = 0x4, scoped, tag = 'scoped memory for forward.1']
    #allocation4 [shape = 's32[1]{0}', space=sflag, size = 0x4, scoped, tag = 'scoped memory for forward.1']
    #allocation5 [shape = 'u8[4096]{0}', space=vmem, size = 0x1000, scoped, tag = 'output window, operand 0, single buffered']
    %7 = vsyncpa [#allocation3], 0
    %8 = vsyncpa [#allocation4], 0
    // Predicated region
    $region2: #{forward.1} parent=1 // pred_check
      _
    $region3: #{forward.1} parent=1 // pred_check_branch
      %10 = sbr.rel (0) target = $region5
    $region4: #{forward.1} parent=1 // pred_region
      _
    $region5: #{forward.1} parent=1 // pred_fallthru
      _
    // Predicated region
    $region6: #{forward.1} parent=1 // pred_check
      _
    $region7: #{forward.1} parent=1 // pred_check_branch
      %12 = sbr.rel (0) target = $region9
    $region8: #{forward.1} parent=1 // pred_region
      %14 = vsyncadd [#allocation3], 0
      %s15 = sshll.u32 %s1, 4
      %s16 = int_to_ptr.hbm [resolvable:$true] %s15
      %s17 = sshll.u32 [#allocation2], 4
      %s18 = int_to_ptr.vmem [resolvable:$true] %s17
      %23 = dma.hbm_to_vmem [thread:$0]  %s16, 8320, %s18, [#allocation3], 128, 128, 8
    $region9: #{forward.1} parent=1 // pred_fallthru
      _
    // Predicated region
    $region10: #{forward.1} parent=1 // pred_check
      _
    $region11: #{forward.1} parent=1 // pred_check_branch
      %25 = sbr.rel (0) target = $region13
    $region12: #{forward.1} parent=1 // pred_region
      %27 = dma.done [#allocation3], 8320
    $region13: #{forward.1} parent=1 // pred_fallthru
      _
    %v28 = vld [vmem:[#allocation2] sm:$0xff]
    %v29 = vld [vmem:[#allocation2 + $0x8] sm:$0xff]
    %v30 = vld [vmem:[#allocation2 + $0x10] sm:$0xff]
    %v31 = vld [vmem:[#allocation2 + $0x18] sm:$0xff]
    %v32 = vld [vmem:[#allocation2 + $0x20] sm:$0xff]
    %v33 = vld [vmem:[#allocation2 + $0x28] sm:$0xff]
    %v34 = vld [vmem:[#allocation2 + $0x30] sm:$0xff]
    %v35 = vld [vmem:[#allocation2 + $0x38] sm:$0xff]
    %v36 = vld [vmem:[#allocation2 + $0x40] sm:$0xff]
    %v37 = vld [vmem:[#allocation2 + $0x48] sm:$0xff]
    %v38 = vld [vmem:[#allocation2 + $0x50] sm:$0xff]
    %v39 = vld [vmem:[#allocation2 + $0x58] sm:$0xff]
    %v40 = vld [vmem:[#allocation2 + $0x60] sm:$0xff]
    %v41 = vld [vmem:[#allocation2 + $0x68] sm:$0xff]
    %v42 = vld [vmem:[#allocation2 + $0x70] sm:$0xff]
    %v43 = vld [vmem:[#allocation2 + $0x78] sm:$0xff]
    %v44 = vld [vmem:[#allocation2 + $0x80] sm:$0xff]
    %v45 = vld [vmem:[#allocation2 + $0x88] sm:$0xff]
    %v46 = vld [vmem:[#allocation2 + $0x90] sm:$0xff]
    %v47 = vld [vmem:[#allocation2 + $0x98] sm:$0xff]
    %v48 = vld [vmem:[#allocation2 + $0xa0] sm:$0xff]
    %v49 = vld [vmem:[#allocation2 + $0xa8] sm:$0xff]
    %v50 = vld [vmem:[#allocation2 + $0xb0] sm:$0xff]
    %v51 = vld [vmem:[#allocation2 + $0xb8] sm:$0xff]
    %v52 = vld [vmem:[#allocation2 + $0xc0] sm:$0xff]
    %v53 = vld [vmem:[#allocation2 + $0xc8] sm:$0xff]
    %v54 = vld [vmem:[#allocation2 + $0xd0] sm:$0xff]
    %v55 = vld [vmem:[#allocation2 + $0xd8] sm:$0xff]
    %v56 = vld [vmem:[#allocation2 + $0xe0] sm:$0xff]
    %v57 = vld [vmem:[#allocation2 + $0xe8] sm:$0xff]
    %v58 = vld [vmem:[#allocation2 + $0xf0] sm:$0xff]
    %v59 = vld [vmem:[#allocation2 + $0xf8] sm:$0xff]
    %v60 = vld [vmem:[#allocation2 + $0x100] sm:$0xff]
    %v61 = vld [vmem:[#allocation2 + $0x108] sm:$0xff]
    %v62 = vld [vmem:[#allocation2 + $0x110] sm:$0xff]
    %v63 = vld [vmem:[#allocation2 + $0x118] sm:$0xff]
    %v64 = vld [vmem:[#allocation2 + $0x120] sm:$0xff]
    %v65 = vld [vmem:[#allocation2 + $0x128] sm:$0xff]
    %v66 = vld [vmem:[#allocation2 + $0x130] sm:$0xff]
    %v67 = vld [vmem:[#allocation2 + $0x138] sm:$0xff]
    %v68 = vld [vmem:[#allocation2 + $0x140] sm:$0xff]
    %v69 = vld [vmem:[#allocation2 + $0x148] sm:$0xff]
    %v70 = vld [vmem:[#allocation2 + $0x150] sm:$0xff]
    %v71 = vld [vmem:[#allocation2 + $0x158] sm:$0xff]
    %v72 = vld [vmem:[#allocation2 + $0x160] sm:$0xff]
    %v73 = vld [vmem:[#allocation2 + $0x168] sm:$0xff]
    %v74 = vld [vmem:[#allocation2 + $0x170] sm:$0xff]
    %v75 = vld [vmem:[#allocation2 + $0x178] sm:$0xff]
    %v76 = vld [vmem:[#allocation2 + $0x180] sm:$0xff]
    %v77 = vld [vmem:[#allocation2 + $0x188] sm:$0xff]
    %v78 = vld [vmem:[#allocation2 + $0x190] sm:$0xff]
    %v79 = vld [vmem:[#allocation2 + $0x198] sm:$0xff]
    %v80 = vld [vmem:[#allocation2 + $0x1a0] sm:$0xff]
    %v81 = vld [vmem:[#allocation2 + $0x1a8] sm:$0xff]
    %v82 = vld [vmem:[#allocation2 + $0x1b0] sm:$0xff]
    %v83 = vld [vmem:[#allocation2 + $0x1b8] sm:$0xff]
    %v84 = vld [vmem:[#allocation2 + $0x1c0] sm:$0xff]
    %v85 = vld [vmem:[#allocation2 + $0x1c8] sm:$0xff]
    %v86 = vld [vmem:[#allocation2 + $0x1d0] sm:$0xff]
    %v87 = vld [vmem:[#allocation2 + $0x1d8] sm:$0xff]
    %v88 = vld [vmem:[#allocation2 + $0x1e0] sm:$0xff]
    %v89 = vld [vmem:[#allocation2 + $0x1e8] sm:$0xff]
    %v90 = vld [vmem:[#allocation2 + $0x1f0] sm:$0xff]
    %v91 = vld [vmem:[#allocation2 + $0x1f8] sm:$0xff]
    %v92 = vld [vmem:[#allocation2 + $0x200] sm:$0x1]
    %v93 = vld [vmem:[#allocation2 + $0x201] sm:$0x1]
    %v94 = vld [vmem:[#allocation2 + $0x202] sm:$0x1]
    %v95 = vld [vmem:[#allocation2 + $0x203] sm:$0x1]
    %v96 = vld [vmem:[#allocation2 + $0x204] sm:$0x1]
    %v97 = vld [vmem:[%s0] sm:$0xff]
    %v98 = vld [vmem:[%s0 + $0x8] sm:$0xff]
    %99 = vmatpush.msra.mxu0 %v43
    %100 = vmatpush.msra.mxu0 %v42
    %101 = vmatpush.msra.mxu0 %v41
    %102 = vmatpush.msra.mxu0 %v40
    %103 = vmatpush.msra.mxu0 %v39
    %104 = vmatpush.msra.mxu0 %v38
    %105 = vmatpush.msra.mxu0 %v37
    %106 = vmatpush.msra.mxu0 %v36
    %107 = vmatpush.msra.mxu0 %v35
    %108 = vmatpush.msra.mxu0 %v34
    %109 = vmatpush.msra.mxu0 %v33
    %110 = vmatpush.msra.mxu0 %v32
    %111 = vmatpush.msra.mxu0 %v31
    %112 = vmatpush.msra.mxu0 %v30
    %113 = vmatpush.msra.mxu0 %v29
    %114 = vmatpush.msra.mxu0 %v28
    %115 = vmatmul.f32.gmra.mxu0 %v97
    %v116 = vpop.f32.mrf.mxu0
    %v117 = vadd.f32 0.0, %v116
    %118 = vdwg.mxu0
    %119 = vmatpush.msra.mxu0 %v59
    %120 = vmatpush.msra.mxu0 %v58
    %121 = vmatpush.msra.mxu0 %v57
    %122 = vmatpush.msra.mxu0 %v56
    %123 = vmatpush.msra.mxu0 %v55
    %124 = vmatpush.msra.mxu0 %v54
    %125 = vmatpush.msra.mxu0 %v53
    %126 = vmatpush.msra.mxu0 %v52
    %127 = vmatpush.msra.mxu0 %v51
    %128 = vmatpush.msra.mxu0 %v50
    %129 = vmatpush.msra.mxu0 %v49
    %130 = vmatpush.msra.mxu0 %v48
    %131 = vmatpush.msra.mxu0 %v47
    %132 = vmatpush.msra.mxu0 %v46
    %133 = vmatpush.msra.mxu0 %v45
    %134 = vmatpush.msra.mxu0 %v44
    %135 = vmatmul.f32.gmra.mxu0 %v98
    %v136 = vpop.f32.mrf.mxu0
    %v137 = vadd.f32 %v117, %v136
    %138 = vdwg.mxu0
    %v139 = vrot.slane %v137, 4
    %v140 = vadd.f32 %v137, %v139
    %v141 = vrot.slane %v140, 2
    %v142 = vadd.f32 %v140, %v141
    %v143 = vrot.slane %v142, 1
    %v144 = vadd.f32 %v142, %v143
    %v145 = vmul.f32 %v137, %v137
    %v146 = vrot.slane %v145, 4
    %v147 = vadd.f32 %v145, %v146
    %v148 = vrot.slane %v147, 2
    %v149 = vadd.f32 %v147, %v148
    %v150 = vrot.slane %v149, 1
    %v151 = vadd.f32 %v149, %v150
    %v152 = vmul.f32 %v144, 0.125
    %v153 = vmul.f32 %v151, 0.125
    %v154 = vmul.f32 %v152, %v152
    %v155 = vsub.f32 %v153, %v154
    %v156 = vadd.f32 %v155, 1e-05
    %v157 = vrsqrt.pop %v156
    %v158 = vmul.f32 %v157, %v156
    %v159 = vmul.f32 %v158, %v157
    %v160 = vmul.f32 0.5, %v159
    %v161 = vsub.f32 1.5, %v160
    %v162 = vmul.f32 %v157, %v161
    %vm163 = vweird.f32 %v156
    %vm164 = vweird.f32 %v157
    %vm165 = vmor %vm163, %vm164
    %v166 = vsel %vm165, %v157, %v162
    %v167 = vmul.f32 %v166, %v92
    %v168 = vsub.f32 %v137, %v152
    %v169 = vperm.slane %v167, 0
    %v170 = vmul.f32 %v168, %v169
    %v171 = vperm.slane %v93, 0
    %v172 = vadd.f32 %v170, %v171
    %vm173 = vcmp.ge.f32.partialorder %v172, 0.0
    %v174 = vmul.f32 %v172, 0.01
    %v175 = vsel %vm173, %v172, %v174
    %176 = vmatpush.msra.mxu0 %v75
    %177 = vmatpush.msra.mxu0 %v74
    %178 = vmatpush.msra.mxu0 %v73
    %179 = vmatpush.msra.mxu0 %v72
    %180 = vmatpush.msra.mxu0 %v71
    %181 = vmatpush.msra.mxu0 %v70
    %182 = vmatpush.msra.mxu0 %v69
    %183 = vmatpush.msra.mxu0 %v68
    %184 = vmatpush.msra.mxu0 %v67
    %185 = vmatpush.msra.mxu0 %v66
    %186 = vmatpush.msra.mxu0 %v65
    %187 = vmatpush.msra.mxu0 %v64
    %188 = vmatpush.msra.mxu0 %v63
    %189 = vmatpush.msra.mxu0 %v62
    %190 = vmatpush.msra.mxu0 %v61
    %191 = vmatpush.msra.mxu0 %v60
    %192 = vmatmul.f32.gmra.mxu0 %v175
    %v193 = vpop.f32.mrf.mxu0
    %v194 = vadd.f32 0.0, %v193
    %195 = vdwg.mxu0
    %v196 = vrot.slane %v194, 4
    %v197 = vadd.f32 %v194, %v196
    %v198 = vrot.slane %v197, 2
    %v199 = vadd.f32 %v197, %v198
    %v200 = vrot.slane %v199, 1
    %v201 = vadd.f32 %v199, %v200
    %v202 = vmul.f32 %v194, %v194
    %v203 = vrot.slane %v202, 4
    %v204 = vadd.f32 %v202, %v203
    %v205 = vrot.slane %v204, 2
    %v206 = vadd.f32 %v204, %v205
    %v207 = vrot.slane %v206, 1
    %v208 = vadd.f32 %v206, %v207
    %v209 = vmul.f32 %v201, 0.125
    %v210 = vmul.f32 %v208, 0.125
    %v211 = vmul.f32 %v209, %v209
    %v212 = vsub.f32 %v210, %v211
    %v213 = vadd.f32 %v212, 1e-05
    %v214 = vrsqrt.pop %v213
    %v215 = vmul.f32 %v214, %v213
    %v216 = vmul.f32 %v215, %v214
    %v217 = vmul.f32 0.5, %v216
    %v218 = vsub.f32 1.5, %v217
    %v219 = vmul.f32 %v214, %v218
    %vm220 = vweird.f32 %v213
    %vm221 = vweird.f32 %v214
    %vm222 = vmor %vm220, %vm221
    %v223 = vsel %vm222, %v214, %v219
    %v224 = vmul.f32 %v223, %v94
    %v225 = vsub.f32 %v194, %v209
    %v226 = vperm.slane %v224, 0
    %v227 = vmul.f32 %v225, %v226
    %v228 = vperm.slane %v95, 0
    %v229 = vadd.f32 %v227, %v228
    %vm230 = vcmp.ge.f32.partialorder %v229, 0.0
    %v231 = vmul.f32 %v229, 0.01
    %v232 = vsel %vm230, %v229, %v231
    %v233 = vperm.slane %v96, 0
    %234 = vmatpush.msra.mxu0 %v91
    %235 = vmatpush.msra.mxu0 %v90
    %236 = vmatpush.msra.mxu0 %v89
    %237 = vmatpush.msra.mxu0 %v88
    %238 = vmatpush.msra.mxu0 %v87
    %239 = vmatpush.msra.mxu0 %v86
    %240 = vmatpush.msra.mxu0 %v85
    %241 = vmatpush.msra.mxu0 %v84
    %242 = vmatpush.msra.mxu0 %v83
    %243 = vmatpush.msra.mxu0 %v82
    %244 = vmatpush.msra.mxu0 %v81
    %245 = vmatpush.msra.mxu0 %v80
    %246 = vmatpush.msra.mxu0 %v79
    %247 = vmatpush.msra.mxu0 %v78
    %248 = vmatpush.msra.mxu0 %v77
    %249 = vmatpush.msra.mxu0 %v76
    %250 = vmatmul.f32.gmra.mxu0 %v232
    %v251 = vpop.f32.mrf.mxu0
    %v252 = vadd.f32 %v233, %v251
    %253 = vdwg.mxu0
    %254 = vst [vmem:[#allocation5] sm:$0xff] %v252
    // Predicated region
    $region14: #{forward.1} parent=1 // pred_check
      _
    $region15: #{forward.1} parent=1 // pred_check_branch
      %256 = sbr.rel (0) target = $region17
    $region16: #{forward.1} parent=1 // pred_region
      %258 = vsyncadd [#allocation4], 0
      %s260 = sshll.u32 [#allocation5], 4
      %s261 = int_to_ptr.vmem [resolvable:$true] %s260
      %s262 = sshll.u32 %s2, 4
      %s263 = int_to_ptr.hbm [resolvable:$true] %s262
      %265 = dma.vmem_to_hbm [thread:$0]  %s261, 128, %s263, [#allocation4]
    $region17: #{forward.1} parent=1 // pred_fallthru
      _
    // Predicated region
    $region18: #{forward.1} parent=1 // pred_check
      _
    $region19: #{forward.1} parent=1 // pred_check_branch
      %267 = sbr.rel (0) target = $region21
    $region20: #{forward.1} parent=1 // pred_region
      %269 = dma.done [#allocation4], 128
    $region21: #{forward.1} parent=1 // pred_fallthru
      _
    %270 = vsyncpa [#allocation3], 1
    %271 = vsyncpa [#allocation4], 1

</llo_original>
